<compile_context>
chip_gen: v6e
topology: v6e:2x2x1
jax: 0.10.0
libtpu: 0.0.40
codegen_flags: <defaults>
</compile_context>

<pallas_src>
import functools

import jax
import jax.numpy as jnp
from jax.experimental import pallas as pl
from jax.experimental.pallas import tpu as pltpu


def _quant_linear_kernel(x_ref, qw_ref, szp_ref, b_ref, o_ref, acc_ref, code_ref,
                         *, bits, pack, groupsize, gpk, k_chunk, tk):
    """One (tm, tn) output tile; grid axis 2 walks K in steps of tk = gpk*groupsize.

    x_ref   : (tm, K)            K-resident activation slab (compute dtype)
    qw_ref  : (tk // pack, tn)   packed int32 GPTQ weights for this K step
    szp_ref : (gpk, 2, tn)       [:, 0] = scale, [:, 1] = scale * zero_point (f32)
    b_ref   : (1, tn)            bias (f32; zeros when the layer has no bias)
    o_ref   : (tm, tn)           output tile (compute dtype)
    acc_ref : (tm, tn) f32       accumulator scratch (persists across K steps)
    code_ref: (2, groupsize, tn) unpacked-code staging scratch (compute dtype)
    """
    ki = pl.program_id(2)

    @pl.when(ki == 0)
    def _init():
        acc_ref[...] = jnp.broadcast_to(b_ref[...], acc_ref.shape).astype(jnp.float32)

    mask = (1 << bits) - 1
    rpg = groupsize // pack          # packed int32 rows per quantization group
    rpc = k_chunk // pack            # packed rows per unpack chunk
    n_chunks = groupsize // k_chunk
    tn = qw_ref.shape[-1]
    cdtype = code_ref.dtype

    # Tiny shift table, hoisted out of the group/chunk loops (the shift op
    # broadcasts it; no full-size iota + multiply per element).
    jshift = bits * jax.lax.broadcasted_iota(jnp.int32, (1, pack, 1), 1)

    for g in range(gpk):                                  # unrolled group loop
        slot = g % 2
        row0 = g * rpg
        # --- chunked unpack into VMEM staging (bounds the live vreg set) ---
        for c in range(n_chunks):
            qc = qw_ref[row0 + c * rpc: row0 + (c + 1) * rpc, :]   # (rpc, tn) int32
            qc3 = jnp.broadcast_to(qc[:, None, :], (rpc, pack, tn))
            codes = ((qc3 >> jshift) & mask).reshape(k_chunk, tn)
            code_ref[slot, c * k_chunk:(c + 1) * k_chunk, :] = codes.astype(cdtype)
        # --- one deep MXU dot per group; scale / zero-point folded in after ---
        sc = szp_ref[g, 0:1, :]                           # (1, tn) f32
        sczp = szp_ref[g, 1:2, :]                         # (1, tn) f32 (= sc * zp)
        k0 = pl.multiple_of(ki * tk + g * groupsize, groupsize)
        xg = x_ref[:, pl.ds(k0, groupsize)]               # (tm, groupsize)
        partial = jnp.dot(xg, code_ref[slot], preferred_element_type=jnp.float32)
        xsum = jnp.sum(xg.astype(jnp.float32), axis=1, keepdims=True)   # (tm, 1)
        acc_ref[...] += sc * partial - xsum * sczp

    @pl.when(ki == pl.num_programs(2) - 1)
    def _store():
        o_ref[...] = acc_ref[...].astype(o_ref.dtype)


def prepare_quant_params(qzeros, scales, bias, *, bits, stored_zeros_minus_one=True):
    """One-time weight-side preparation (hoisted out of the per-call path).

    Returns (szp, bias2d):
      szp    : (groups, 2, outfeatures) f32; [:, 0]=scale, [:, 1]=scale*zero_point
      bias2d : (1, outfeatures) f32 (zeros when bias is None)
    """
    if bits not in (2, 4, 8):
        raise NotImplementedError("Only 2, 4, 8 bits are supported.")
    pack = 32 // bits
    mask = (1 << bits) - 1
    outfeatures = scales.shape[-1]
    n_idx = jnp.arange(outfeatures)
    zeros = (qzeros[:, n_idx // pack] >> ((n_idx % pack) * bits)) & mask
    zp = zeros.astype(jnp.float32)
    if stored_zeros_minus_one:            # classic GPTQ stores (zero - 1)
        zp = zp + 1.0
    sc = scales.astype(jnp.float32)
    szp = jnp.stack([sc, sc * zp], axis=1)                  # (groups, 2, N)
    if bias is None:
        bias2d = jnp.zeros((1, outfeatures), jnp.float32)
    else:
        bias2d = bias.astype(jnp.float32).reshape(1, outfeatures)
    return szp, bias2d


def quant_linear_forward(x, qweight, qzeros=None, scales=None, bias=None, *,
                         bits, groupsize, prepared=None, tn=None, tm_max=256,
                         mxu_bf16=False, stored_zeros_minus_one=True):
    """JAX/Pallas equivalent of QuantLinear.forward for bits in {2, 4, 8}."""
    if bits not in (2, 4, 8):
        # TODO(synk): bits == 3 (vecquant3matmul packing) not implemented.
        raise NotImplementedError("Only 2, 4, 8 bits supported in this kernel.")
    pack = 32 // bits

    infeatures = x.shape[-1]
    kp, outfeatures = qweight.shape
    assert kp * pack == infeatures
    gs = infeatures if groupsize == -1 else groupsize
    # TODO(synk): partial trailing group (infeatures % groupsize != 0) unsupported.
    assert infeatures % gs == 0, "partial trailing group not supported"
    groups = infeatures // gs
    if gs % 128 != 0 and groups != 1:
        raise NotImplementedError(
            "groupsize must be a multiple of 128 (or cover all of infeatures).")

    out_dtype = x.dtype
    outshape = list(x.shape)
    outshape[-1] = outfeatures

    if prepared is None:
        prepared = prepare_quant_params(
            qzeros, scales, bias, bits=bits,
            stored_zeros_minus_one=stored_zeros_minus_one)
    szp, bias2d = prepared

    # Compute dtype: bf16 activations stay bf16 (native MXU rate); f32 stays f32
    # unless mxu_bf16 (accuracy knob: codes <= 2^bits - 1 are exact in bf16).
    if x.dtype == jnp.bfloat16 or mxu_bf16:
        cdtype = jnp.bfloat16
    else:
        cdtype = jnp.float32
    x2 = x.reshape(-1, infeatures).astype(cdtype)
    m = x2.shape[0]
    x_item = jnp.dtype(cdtype).itemsize

    # ---- M tiling; budget the K-resident x slab for v7x's 64 MiB VMEM ----
    if m <= tm_max:
        tm, m_pad = m, m
    else:
        tm = tm_max
        while tm > 64 and 2 * tm * infeatures * x_item > 24 * 1024 * 1024:
            tm //= 2
        m_pad = pl.cdiv(m, tm) * tm
        if m_pad != m:
            x2 = jnp.pad(x2, ((0, m_pad - m), (0, 0)))
    m_tiles = m_pad // tm

    # ---- N tiling (256 fills v6e/v7x MXU; 512 for decode; 128 is the v5e knob) ----
    if tn is None:
        if m <= 32 and outfeatures % 512 == 0:
            tn = 512
        elif outfeatures % 256 == 0:
            tn = 256
        elif outfeatures % 128 == 0:
            tn = 128
        else:
            tn = outfeatures  # TODO(synk): non-128-multiple N -> masked stores.
    assert outfeatures % tn == 0
    # Keep >= 2 blocks on the parallel axes so both v7x TensorCores get work.
    if m_tiles * (outfeatures // tn) < 2 and tn % 256 == 0:
        tn //= 2
    n_tiles = outfeatures // tn

    # ---- K tiling: several groups per grid step (bigger DMAs, fewer steps) ----
    gpk = 1
    for cand in range(1, groups + 1):
        if groups % cand != 0 or cand > 16:
            continue
        if cand * gs * tn * bits // 8 <= 512 * 1024:
            gpk = cand
    tk = gpk * gs
    k_steps = groups // gpk

    # Unpack chunk size: bounds live int32 intermediates, keeps 8-sublane-aligned
    # packed-row slices.
    k_chunk = min(gs, max(64, 8 * pack))
    if gs % k_chunk != 0:
        k_chunk = gs

    kernel = functools.partial(
        _quant_linear_kernel, bits=bits, pack=pack, groupsize=gs,
        gpk=gpk, k_chunk=k_chunk, tk=tk)

    vmem_bytes = (2 * tm * infeatures * x_item          # x slab (double-buffered)
                  + 2 * (tk // pack) * tn * 4           # packed weights
                  + 2 * (gpk * 2 + 1) * tn * 4          # scale/zero-point + bias
                  + 2 * tm * tn * x_item                # output
                  + tm * tn * 4                         # accumulator scratch
                  + 2 * gs * tn * x_item)               # code staging scratch
    vmem_limit = int(min(max(2 * vmem_bytes, 32 << 20), 64 << 20))

    y = pl.pallas_call(
        kernel,
        out_shape=jax.ShapeDtypeStruct((m_pad, outfeatures), cdtype),
        grid_spec=pltpu.PrefetchScalarGridSpec(
            num_scalar_prefetch=0,
            grid=(m_tiles, n_tiles, k_steps),
            in_specs=[
                # x: K-resident per M tile (re-DMA'd only when mi changes).
                pl.BlockSpec((tm, infeatures), lambda mi, ni, ki: (mi, 0)),
                # packed weights: one (tk//pack, tn) slab per K step.
                pl.BlockSpec((tk // pack, tn), lambda mi, ni, ki: (ki, ni)),
                # merged scale / scale*zero-point side input (one small DMA).
                pl.BlockSpec((gpk, 2, tn), lambda mi, ni, ki: (ki, 0, ni)),
                # bias (zeros when the layer has no bias).
                pl.BlockSpec((1, tn), lambda mi, ni, ki: (0, ni)),
            ],
            out_specs=pl.BlockSpec((tm, tn), lambda mi, ni, ki: (mi, ni)),
            scratch_shapes=[pltpu.VMEM((tm, tn), jnp.float32),
                            pltpu.VMEM((2, gs, tn), cdtype)],
        ),
        compiler_params=pltpu.CompilerParams(
            dimension_semantics=("parallel", "parallel", "arbitrary"),
            vmem_limit_bytes=vmem_limit),
    )(x2, qweight, szp, bias2d)

    return y[:m].astype(out_dtype).reshape(outshape)


def _reference(x, qweight, qzeros, scales, bias, *, bits, groupsize):
    """Pure-JAX reference: unpack full weight matrix, then dense f32 matmul."""
    pack = 32 // bits
    mask = (1 << bits) - 1
    infeatures = x.shape[-1]
    outfeatures = qweight.shape[1]
    gs = infeatures if groupsize == -1 else groupsize

    k_idx = jnp.arange(infeatures)
    iw = (qweight[k_idx // pack] >> ((k_idx % pack) * bits)[:, None]) & mask
    n_idx = jnp.arange(outfeatures)
    zeros = (qzeros[:, n_idx // pack] >> ((n_idx % pack) * bits)) & mask
    zero_pt = (zeros + 1).astype(jnp.float32)

    g = k_idx // gs
    w = scales[g].astype(jnp.float32) * (iw.astype(jnp.float32) - zero_pt[g])

    x2 = x.reshape(-1, infeatures).astype(jnp.float32)
    y = x2 @ w
    if bias is not None:
        y = y + bias.astype(jnp.float32)
    outshape = list(x.shape)
    outshape[-1] = outfeatures
    return y.astype(x.dtype).reshape(outshape)


def _make_case(key, *, bits, groupsize, infeatures, outfeatures, xshape, xdtype):
    pack = 32 // bits
    kp = infeatures // pack
    gs = infeatures if groupsize == -1 else groupsize
    groups = infeatures // gs
    k1, k2, k3, k4, k5 = jax.random.split(key, 5)
    qweight = jax.random.randint(
        k1, (kp, outfeatures),
        minval=jnp.iinfo(jnp.int32).min, maxval=jnp.iinfo(jnp.int32).max,
        dtype=jnp.int32)
    qzeros = jax.random.randint(
        k2, (groups, outfeatures // 256 * (bits * 8)),
        minval=jnp.iinfo(jnp.int32).min, maxval=jnp.iinfo(jnp.int32).max,
        dtype=jnp.int32)
    scales = jax.random.uniform(k3, (groups, outfeatures),
                                minval=0.01, maxval=0.1, dtype=jnp.float32)
    bias = 0.1 * jax.random.normal(k4, (outfeatures,), dtype=jnp.float32)
    x = jax.random.normal(k5, xshape, dtype=jnp.float32).astype(xdtype)
    return x, qweight, qzeros, scales, bias


if __name__ == "__main__":
    key = jax.random.PRNGKey(0)
    k1, k2, k3 = jax.random.split(key, 3)

    # Case 1: bits=4, grouped quantization, f32 activations, 2 groups per K step.
    x, qw, qz, sc, b = _make_case(
        k1, bits=4, groupsize=128, infeatures=256, outfeatures=256,
        xshape=(2, 8, 256), xdtype=jnp.float32)
    y = jax.block_until_ready(
        quant_linear_forward(x, qw, qz, sc, b, bits=4, groupsize=128))
    y_ref = _reference(x, qw, qz, sc, b, bits=4, groupsize=128)
    assert y.shape == (2, 8, 256) and y.dtype == x.dtype
    assert jnp.allclose(y, y_ref, rtol=1e-2, atol=1e-2), (
        float(jnp.max(jnp.abs(y - y_ref))))

    # Case 2: bits=2, groupsize=-1 (single group), bf16 activations (bf16 MXU).
    x, qw, qz, sc, b = _make_case(
        k2, bits=2, groupsize=-1, infeatures=128, outfeatures=256,
        xshape=(4, 128), xdtype=jnp.bfloat16)
    y = jax.block_until_ready(
        quant_linear_forward(x, qw, qz, sc, b, bits=2, groupsize=-1))
    y_ref = _reference(x, qw, qz, sc, b, bits=2, groupsize=-1)
    assert y.shape == (4, 256) and y.dtype == jnp.bfloat16
    assert jnp.allclose(y.astype(jnp.float32), y_ref.astype(jnp.float32),
                        rtol=2e-2, atol=2e-2), (
        float(jnp.max(jnp.abs(y.astype(jnp.float32) - y_ref.astype(jnp.float32)))))

    # Case 3: bits=8, bias=None, one-time prepared side inputs, and the
    # M-padding / multi-M-tile path (tm_max=8 forces two M tiles).
    x, qw, qz, sc, _ = _make_case(
        k3, bits=8, groupsize=128, infeatures=256, outfeatures=512,
        xshape=(12, 256), xdtype=jnp.float32)
    prepared = prepare_quant_params(qz, sc, None, bits=8)
    y = jax.block_until_ready(
        quant_linear_forward(x, qw, bits=8, groupsize=128,
                             prepared=prepared, tm_max=8))
    y_ref = _reference(x, qw, qz, sc, None, bits=8, groupsize=128)
    assert y.shape == (12, 512) and y.dtype == jnp.float32
    assert jnp.allclose(y, y_ref, rtol=1e-2, atol=1e-2), (
        float(jnp.max(jnp.abs(y - y_ref))))

    print("KERNEL_OK")
</pallas_src>

<mosaic_0001>
module attributes {stable_mosaic.version = 11 : i64} {
  func.func @_quant_linear_kernel(%arg0: i32, %arg1: i32, %arg2: i32, %arg3: memref<16x256xf32, #tpu.memory_space<vmem>>, %arg4: memref<32x128xi32, #tpu.memory_space<vmem>>, %arg5: memref<2x2x128xf32, #tpu.memory_space<vmem>>, %arg6: memref<1x128xf32, #tpu.memory_space<vmem>>, %arg7: memref<16x128xf32, #tpu.memory_space<vmem>>, %arg8: memref<16x128xf32, #tpu.memory_space<vmem>>, %arg9: memref<2x128x128xf32, #tpu.memory_space<vmem>>) attributes {dimension_semantics = [#tpu.dimension_semantics<parallel>, #tpu.dimension_semantics<parallel>, #tpu.dimension_semantics<arbitrary>], iteration_bounds = array<i64: 1, 2, 1>, scalar_prefetch = 0 : i64, scratch_operands = 2 : i64, tpu.core_type = #tpu.core_type<tc>, window_params = [{transform_indices = @transform_0, window_bounds = array<i64: 16, 256>}, {transform_indices = @transform_1, window_bounds = array<i64: 32, 128>}, {transform_indices = @transform_2, window_bounds = array<i64: 2, 2, 128>}, {transform_indices = @transform_3, window_bounds = array<i64: 1, 128>}, {transform_indices = @transform_4, window_bounds = array<i64: 16, 128>}]} {
    %c0_i32 = arith.constant 0 : i32
    %0 = arith.cmpi eq, %arg2, %c0_i32 : i32
    %1 = arith.extui %0 : i1 to i32
    %c0_i32_0 = arith.constant 0 : i32
    %2 = arith.cmpi ne, %1, %c0_i32_0 : i32
    scf.if %2 {
      %c0_53 = arith.constant 0 : index
      %c0_54 = arith.constant 0 : index
      %107 = vector.load %arg6[%c0_53, %c0_54] : memref<1x128xf32, #tpu.memory_space<vmem>>, vector<1x128xf32>
      %108 = vector.shape_cast %107 : vector<1x128xf32> to vector<1x128xf32>
      %109 = vector.broadcast %108 : vector<1x128xf32> to vector<16x128xf32>
      %c0_55 = arith.constant 0 : index
      %c0_56 = arith.constant 0 : index
      %110 = vector.load %arg8[%c0_55, %c0_56] : memref<16x128xf32, #tpu.memory_space<vmem>>, vector<16x128xf32>
      tpu.vector_store %arg8[%c0_55, %c0_56], %109 {strides = array<i32>} : memref<16x128xf32, #tpu.memory_space<vmem>>, vector<16x128xf32>,
    } else {
    }
    %3 = tpu.iota {dimensions = array<i32: 1>} : vector<1x8x1xi32>
    %c4_i32 = arith.constant 4 : i32
    %4 = vector.broadcast %c4_i32 : i32 to vector<1x8x1xi32>
    %5 = arith.muli %4, %3 : vector<1x8x1xi32>
    %c0 = arith.constant 0 : index
    %c0_1 = arith.constant 0 : index
    %6 = vector.load %arg4[%c0, %c0_1] : memref<32x128xi32, #tpu.memory_space<vmem>>, vector<8x128xi32>
    %7 = vector.shape_cast %6 : vector<8x128xi32> to vector<8x1x128xi32>
    %8 = vector.shape_cast %7 : vector<8x1x128xi32> to vector<8x1x128xi32>
    %9 = vector.broadcast %8 : vector<8x1x128xi32> to vector<8x8x128xi32>
    %10 = vector.broadcast %5 : vector<1x8x1xi32> to vector<8x8x128xi32>
    %11 = arith.shrsi %9, %10 : vector<8x8x128xi32>
    %c15_i32 = arith.constant 15 : i32
    %12 = vector.broadcast %c15_i32 : i32 to vector<8x8x128xi32>
    %13 = arith.andi %11, %12 : vector<8x8x128xi32>
    %14 = vector.shape_cast %13 : vector<8x8x128xi32> to vector<64x128xi32>
    %15 = arith.sitofp %14 : vector<64x128xi32> to vector<64x128xf32>
    %c0_2 = arith.constant 0 : index
    %c0_3 = arith.constant 0 : index
    %c0_4 = arith.constant 0 : index
    %16 = vector.load %arg9[%c0_2, %c0_3, %c0_4] : memref<2x128x128xf32, #tpu.memory_space<vmem>>, vector<1x64x128xf32>
    %17 = vector.shape_cast %16 : vector<1x64x128xf32> to vector<64x128xf32>
    %18 = vector.shape_cast %15 : vector<64x128xf32> to vector<1x64x128xf32>
    tpu.vector_store %arg9[%c0_2, %c0_3, %c0_4], %18 {strides = array<i32>} : memref<2x128x128xf32, #tpu.memory_space<vmem>>, vector<1x64x128xf32>,
    %c8 = arith.constant 8 : index
    %c0_5 = arith.constant 0 : index
    %19 = vector.load %arg4[%c8, %c0_5] : memref<32x128xi32, #tpu.memory_space<vmem>>, vector<8x128xi32>
    %20 = vector.shape_cast %19 : vector<8x128xi32> to vector<8x1x128xi32>
    %21 = vector.shape_cast %20 : vector<8x1x128xi32> to vector<8x1x128xi32>
    %22 = vector.broadcast %21 : vector<8x1x128xi32> to vector<8x8x128xi32>
    %23 = vector.broadcast %5 : vector<1x8x1xi32> to vector<8x8x128xi32>
    %24 = arith.shrsi %22, %23 : vector<8x8x128xi32>
    %c15_i32_6 = arith.constant 15 : i32
    %25 = vector.broadcast %c15_i32_6 : i32 to vector<8x8x128xi32>
    %26 = arith.andi %24, %25 : vector<8x8x128xi32>
    %27 = vector.shape_cast %26 : vector<8x8x128xi32> to vector<64x128xi32>
    %28 = arith.sitofp %27 : vector<64x128xi32> to vector<64x128xf32>
    %c0_7 = arith.constant 0 : index
    %c64 = arith.constant 64 : index
    %c0_8 = arith.constant 0 : index
    %29 = vector.load %arg9[%c0_7, %c64, %c0_8] : memref<2x128x128xf32, #tpu.memory_space<vmem>>, vector<1x64x128xf32>
    %30 = vector.shape_cast %29 : vector<1x64x128xf32> to vector<64x128xf32>
    %31 = vector.shape_cast %28 : vector<64x128xf32> to vector<1x64x128xf32>
    tpu.vector_store %arg9[%c0_7, %c64, %c0_8], %31 {strides = array<i32>} : memref<2x128x128xf32, #tpu.memory_space<vmem>>, vector<1x64x128xf32>,
    %c0_9 = arith.constant 0 : index
    %c0_10 = arith.constant 0 : index
    %c0_11 = arith.constant 0 : index
    %32 = vector.load %arg5[%c0_9, %c0_10, %c0_11] : memref<2x2x128xf32, #tpu.memory_space<vmem>>, vector<1x1x128xf32>
    %33 = vector.shape_cast %32 : vector<1x1x128xf32> to vector<1x128xf32>
    %c0_12 = arith.constant 0 : index
    %c1 = arith.constant 1 : index
    %c0_13 = arith.constant 0 : index
    %34 = vector.load %arg5[%c0_12, %c1, %c0_13] : memref<2x2x128xf32, #tpu.memory_space<vmem>>, vector<1x1x128xf32>
    %35 = vector.shape_cast %34 : vector<1x1x128xf32> to vector<1x128xf32>
    %c256_i32 = arith.constant 256 : i32
    %36 = arith.muli %arg2, %c256_i32 : i32
    %c0_i32_14 = arith.constant 0 : i32
    %37 = arith.addi %36, %c0_i32_14 : i32
    %38 = tpu.assume_multiple %37, 128 : i32
    %c0_15 = arith.constant 0 : index
    %39 = arith.index_cast %38 : i32 to index
    %40 = vector.load %arg3[%c0_15, %39] : memref<16x256xf32, #tpu.memory_space<vmem>>, vector<16x128xf32>
    %c0_16 = arith.constant 0 : index
    %c0_17 = arith.constant 0 : index
    %c0_18 = arith.constant 0 : index
    %41 = vector.load %arg9[%c0_16, %c0_17, %c0_18] : memref<2x128x128xf32, #tpu.memory_space<vmem>>, vector<1x128x128xf32>
    %42 = vector.shape_cast %41 : vector<1x128x128xf32> to vector<128x128xf32>
    %cst = arith.constant dense<0.000000e+00> : vector<16x128xf32>
    %43 = tpu.matmul %40, %42, %cst {dimension_numbers = #tpu.dot_dimension_numbers<[1], [0], [0], [1], [0, 0, 1, 1], [], []>} : vector<16x128xf32>, vector<128x128xf32>, vector<16x128xf32> -> vector<16x128xf32>
    %cst_19 = arith.constant dense<0.000000e+00> : vector<16xf32>
    %44 = vector.multi_reduction <add>, %40, %cst_19 [1] : vector<16x128xf32> to vector<16xf32>
    %45 = vector.shape_cast %44 : vector<16xf32> to vector<16x1xf32>
    %c0_20 = arith.constant 0 : index
    %c0_21 = arith.constant 0 : index
    %46 = vector.load %arg8[%c0_20, %c0_21] : memref<16x128xf32, #tpu.memory_space<vmem>>, vector<16x128xf32>
    %47 = vector.broadcast %33 : vector<1x128xf32> to vector<16x128xf32>
    %48 = arith.mulf %47, %43 : vector<16x128xf32>
    %49 = vector.broadcast %45 : vector<16x1xf32> to vector<16x128xf32>
    %50 = vector.broadcast %35 : vector<1x128xf32> to vector<16x128xf32>
    %51 = arith.mulf %49, %50 : vector<16x128xf32>
    %52 = arith.subf %48, %51 : vector<16x128xf32>
    %53 = arith.addf %46, %52 : vector<16x128xf32>
    %c0_22 = arith.constant 0 : index
    %c0_23 = arith.constant 0 : index
    %54 = vector.load %arg8[%c0_22, %c0_23] : memref<16x128xf32, #tpu.memory_space<vmem>>, vector<16x128xf32>
    tpu.vector_store %arg8[%c0_22, %c0_23], %53 {strides = array<i32>} : memref<16x128xf32, #tpu.memory_space<vmem>>, vector<16x128xf32>,
    %c16 = arith.constant 16 : index
    %c0_24 = arith.constant 0 : index
    %55 = vector.load %arg4[%c16, %c0_24] : memref<32x128xi32, #tpu.memory_space<vmem>>, vector<8x128xi32>
    %56 = vector.shape_cast %55 : vector<8x128xi32> to vector<8x1x128xi32>
    %57 = vector.shape_cast %56 : vector<8x1x128xi32> to vector<8x1x128xi32>
    %58 = vector.broadcast %57 : vector<8x1x128xi32> to vector<8x8x128xi32>
    %59 = vector.broadcast %5 : vector<1x8x1xi32> to vector<8x8x128xi32>
    %60 = arith.shrsi %58, %59 : vector<8x8x128xi32>
    %c15_i32_25 = arith.constant 15 : i32
    %61 = vector.broadcast %c15_i32_25 : i32 to vector<8x8x128xi32>
    %62 = arith.andi %60, %61 : vector<8x8x128xi32>
    %63 = vector.shape_cast %62 : vector<8x8x128xi32> to vector<64x128xi32>
    %64 = arith.sitofp %63 : vector<64x128xi32> to vector<64x128xf32>
    %c1_26 = arith.constant 1 : index
    %c0_27 = arith.constant 0 : index
    %c0_28 = arith.constant 0 : index
    %65 = vector.load %arg9[%c1_26, %c0_27, %c0_28] : memref<2x128x128xf32, #tpu.memory_space<vmem>>, vector<1x64x128xf32>
    %66 = vector.shape_cast %65 : vector<1x64x128xf32> to vector<64x128xf32>
    %67 = vector.shape_cast %64 : vector<64x128xf32> to vector<1x64x128xf32>
    tpu.vector_store %arg9[%c1_26, %c0_27, %c0_28], %67 {strides = array<i32>} : memref<2x128x128xf32, #tpu.memory_space<vmem>>, vector<1x64x128xf32>,
    %c24 = arith.constant 24 : index
    %c0_29 = arith.constant 0 : index
    %68 = vector.load %arg4[%c24, %c0_29] : memref<32x128xi32, #tpu.memory_space<vmem>>, vector<8x128xi32>
    %69 = vector.shape_cast %68 : vector<8x128xi32> to vector<8x1x128xi32>
    %70 = vector.shape_cast %69 : vector<8x1x128xi32> to vector<8x1x128xi32>
    %71 = vector.broadcast %70 : vector<8x1x128xi32> to vector<8x8x128xi32>
    %72 = vector.broadcast %5 : vector<1x8x1xi32> to vector<8x8x128xi32>
    %73 = arith.shrsi %71, %72 : vector<8x8x128xi32>
    %c15_i32_30 = arith.constant 15 : i32
    %74 = vector.broadcast %c15_i32_30 : i32 to vector<8x8x128xi32>
    %75 = arith.andi %73, %74 : vector<8x8x128xi32>
    %76 = vector.shape_cast %75 : vector<8x8x128xi32> to vector<64x128xi32>
    %77 = arith.sitofp %76 : vector<64x128xi32> to vector<64x128xf32>
    %c1_31 = arith.constant 1 : index
    %c64_32 = arith.constant 64 : index
    %c0_33 = arith.constant 0 : index
    %78 = vector.load %arg9[%c1_31, %c64_32, %c0_33] : memref<2x128x128xf32, #tpu.memory_space<vmem>>, vector<1x64x128xf32>
    %79 = vector.shape_cast %78 : vector<1x64x128xf32> to vector<64x128xf32>
    %80 = vector.shape_cast %77 : vector<64x128xf32> to vector<1x64x128xf32>
    tpu.vector_store %arg9[%c1_31, %c64_32, %c0_33], %80 {strides = array<i32>} : memref<2x128x128xf32, #tpu.memory_space<vmem>>, vector<1x64x128xf32>,
    %c1_34 = arith.constant 1 : index
    %c0_35 = arith.constant 0 : index
    %c0_36 = arith.constant 0 : index
    %81 = vector.load %arg5[%c1_34, %c0_35, %c0_36] : memref<2x2x128xf32, #tpu.memory_space<vmem>>, vector<1x1x128xf32>
    %82 = vector.shape_cast %81 : vector<1x1x128xf32> to vector<1x128xf32>
    %c1_37 = arith.constant 1 : index
    %c1_38 = arith.constant 1 : index
    %c0_39 = arith.constant 0 : index
    %83 = vector.load %arg5[%c1_37, %c1_38, %c0_39] : memref<2x2x128xf32, #tpu.memory_space<vmem>>, vector<1x1x128xf32>
    %84 = vector.shape_cast %83 : vector<1x1x128xf32> to vector<1x128xf32>
    %c256_i32_40 = arith.constant 256 : i32
    %85 = arith.muli %arg2, %c256_i32_40 : i32
    %c128_i32 = arith.constant 128 : i32
    %86 = arith.addi %85, %c128_i32 : i32
    %87 = tpu.assume_multiple %86, 128 : i32
    %c0_41 = arith.constant 0 : index
    %88 = arith.index_cast %87 : i32 to index
    %89 = vector.load %arg3[%c0_41, %88] : memref<16x256xf32, #tpu.memory_space<vmem>>, vector<16x128xf32>
    %c1_42 = arith.constant 1 : index
    %c0_43 = arith.constant 0 : index
    %c0_44 = arith.constant 0 : index
    %90 = vector.load %arg9[%c1_42, %c0_43, %c0_44] : memref<2x128x128xf32, #tpu.memory_space<vmem>>, vector<1x128x128xf32>
    %91 = vector.shape_cast %90 : vector<1x128x128xf32> to vector<128x128xf32>
    %cst_45 = arith.constant dense<0.000000e+00> : vector<16x128xf32>
    %92 = tpu.matmul %89, %91, %cst_45 {dimension_numbers = #tpu.dot_dimension_numbers<[1], [0], [0], [1], [0, 0, 1, 1], [], []>} : vector<16x128xf32>, vector<128x128xf32>, vector<16x128xf32> -> vector<16x128xf32>
    %cst_46 = arith.constant dense<0.000000e+00> : vector<16xf32>
    %93 = vector.multi_reduction <add>, %89, %cst_46 [1] : vector<16x128xf32> to vector<16xf32>
    %94 = vector.shape_cast %93 : vector<16xf32> to vector<16x1xf32>
    %c0_47 = arith.constant 0 : index
    %c0_48 = arith.constant 0 : index
    %95 = vector.load %arg8[%c0_47, %c0_48] : memref<16x128xf32, #tpu.memory_space<vmem>>, vector<16x128xf32>
    %96 = vector.broadcast %82 : vector<1x128xf32> to vector<16x128xf32>
    %97 = arith.mulf %96, %92 : vector<16x128xf32>
    %98 = vector.broadcast %94 : vector<16x1xf32> to vector<16x128xf32>
    %99 = vector.broadcast %84 : vector<1x128xf32> to vector<16x128xf32>
    %100 = arith.mulf %98, %99 : vector<16x128xf32>
    %101 = arith.subf %97, %100 : vector<16x128xf32>
    %102 = arith.addf %95, %101 : vector<16x128xf32>
    %c0_49 = arith.constant 0 : index
    %c0_50 = arith.constant 0 : index
    %103 = vector.load %arg8[%c0_49, %c0_50] : memref<16x128xf32, #tpu.memory_space<vmem>>, vector<16x128xf32>
    tpu.vector_store %arg8[%c0_49, %c0_50], %102 {strides = array<i32>} : memref<16x128xf32, #tpu.memory_space<vmem>>, vector<16x128xf32>,
    %c0_i32_51 = arith.constant 0 : i32
    %104 = arith.cmpi eq, %arg2, %c0_i32_51 : i32
    %105 = arith.extui %104 : i1 to i32
    %c0_i32_52 = arith.constant 0 : i32
    %106 = arith.cmpi ne, %105, %c0_i32_52 : i32
    scf.if %106 {
      %c0_53 = arith.constant 0 : index
      %c0_54 = arith.constant 0 : index
      %107 = vector.load %arg8[%c0_53, %c0_54] : memref<16x128xf32, #tpu.memory_space<vmem>>, vector<16x128xf32>
      %c0_55 = arith.constant 0 : index
      %c0_56 = arith.constant 0 : index
      %108 = vector.load %arg7[%c0_55, %c0_56] : memref<16x128xf32, #tpu.memory_space<vmem>>, vector<16x128xf32>
      tpu.vector_store %arg7[%c0_55, %c0_56], %107 {strides = array<i32>} : memref<16x128xf32, #tpu.memory_space<vmem>>, vector<16x128xf32>,
    } else {
    }
    return
  }
  func.func @transform_0(%arg0: i32, %arg1: i32, %arg2: i32) -> (i32, i32) {
    %c0_i32 = arith.constant 0 : i32
    %c0_i32_0 = arith.constant 0 : i32
    return %arg0, %c0_i32 : i32, i32
  }
  func.func @transform_1(%arg0: i32, %arg1: i32, %arg2: i32) -> (i32, i32) {
    %c0_i32 = arith.constant 0 : i32
    return %arg2, %arg1 : i32, i32
  }
  func.func @transform_2(%arg0: i32, %arg1: i32, %arg2: i32) -> (i32, i32, i32) {
    %c0_i32 = arith.constant 0 : i32
    %c0_i32_0 = arith.constant 0 : i32
    return %arg2, %c0_i32, %arg1 : i32, i32, i32
  }
  func.func @transform_3(%arg0: i32, %arg1: i32, %arg2: i32) -> (i32, i32) {
    %c0_i32 = arith.constant 0 : i32
    %c0_i32_0 = arith.constant 0 : i32
    return %c0_i32, %arg1 : i32, i32
  }
  func.func @transform_4(%arg0: i32, %arg1: i32, %arg2: i32) -> (i32, i32) {
    %c0_i32 = arith.constant 0 : i32
    return %arg0, %arg1 : i32, i32
  }
}

</mosaic_0001>

<llo_original>
// kernel: tpu_custom_call.1
$region0: #{tpu_custom_call.1}
  #allocation0 [shape = 'u32[]', space=smem, size = 0x4, offset = 0x4, fixed_abs, tag = 'smem constant byte address 0x4 - core index']
  #allocation1 [shape = 'u32[144,128]{1,0:T(1,128)}', space=vmem, size = 0x12000, scoped, tag = 'internal scratch']
  #allocation2 [shape = 'f32[16,128]{1,0:T(8,128)}', space=vmem, size = 0x2000, scoped, tag = 'scratch operand']
  #allocation3 [shape = 'f32[2,128,128]{2,1,0:T(8,128)}', space=vmem, size = 0x20000, scoped, tag = 'scratch operand']
  %s0 = inlined_call_operand.hbm [shape: f32[16,256], index: 0, kind: input, shape index: {}]
  %s1 = inlined_call_operand.hbm [shape: s32[32,256], index: 1, kind: input, shape index: {}]
  %s2 = inlined_call_operand.hbm [shape: f32[2,2,256], index: 2, kind: input, shape index: {}]
  %s3 = inlined_call_operand.vmem [shape: f32[1,256], index: 3, kind: input, shape index: {}]
  %s4 = inlined_call_operand.hbm [shape: f32[16,256], index: 4, kind: output, shape index: {}]
  %s5 = sld [smem:[#allocation0]]
  $region69: #{tpu_custom_call.1} parent=0
    _
  %s7 = ssub.s32 1, %s5
  %s8 = scalar_select 0, %s7, %s5
  $region1: #{tpu_custom_call.1} parent=0
    #allocation4 [shape = 'u8[16384]{0}', space=vmem, size = 0x4000, scoped, tag = 'input window, operand 0, single buffered']
    #allocation5 [shape = 's32[2]{0}', space=sflag, size = 0x8, scoped, tag = 'scoped memory for tpu_custom_call.1']
    #allocation6 [shape = 's32[2]{0}', space=sflag, size = 0x8, scoped, tag = 'scoped memory for tpu_custom_call.1']
    #allocation7 [shape = 'u8[32768]{0}', space=vmem, size = 0x8000, scoped, tag = 'input window, operand 1']
    #allocation8 [shape = 's32[2]{0}', space=sflag, size = 0x8, scoped, tag = 'scoped memory for tpu_custom_call.1']
    #allocation9 [shape = 'u8[4096]{0}', space=vmem, size = 0x1000, scoped, tag = 'input window, operand 2']
    #allocation10 [shape = 'u8[16384]{0}', space=vmem, size = 0x4000, scoped, tag = 'output window, operand 0']
    %9 = vsyncpa [#allocation5], 0
    %10 = vsyncpa [#allocation8], 0
    %s11 = scalar_lea.sflag [#allocation8], 1
    %12 = vsyncpa %s11, 0
    %13 = vsyncpa [#allocation6], 0
    %s14 = scalar_lea.sflag [#allocation6], 1
    %15 = vsyncpa %s14, 0
    loop: start=0, step=1, limit=4
    $region2: #{tpu_custom_call.1} parent=1 // loop_pre_header
      _
    $region3: #{tpu_custom_call.1} parent=1 // loop_header
      %s17 = sphi 0, %s21
      %p18 = scmp.ge.s32.totalorder %s17, 4
      %s24 = sphi 0, %s43
      %s25 = sphi 0, %s39
      %s26 = sphi 0, %s35
      %s27 = sphi 0, %s24
      %s28 = sphi 0, %s25
      %s29 = sphi 0, %s26
      %s30 = sphi 0, %s27
      %s31 = sphi 0, %s28
      %s32 = sphi 0, %s29
      %s46 = sphi 0, %s48
      %s49 = sphi 0, %s46
      %s50 = sphi 0, %s49
      %s66 = sphi 0, %s50
      %s74 = sphi 0, %s76
      %s77 = sphi 0, %s74
      %s78 = sphi 0, %s77
      %s94 = sphi 0, %s78
      %s102 = sphi 0, %s104
      %s105 = sphi 0, %s102
      %s106 = sphi 0, %s105
      %s122 = sphi 0, %s106
      %s128 = sphi 0, %s130
      %s131 = sphi 0, %s128
      %s132 = sphi 0, %s131
      %s148 = sphi 0, %s132
      %s156 = sphi 0, %s158
      %s159 = sphi 0, %s156
      %s160 = sphi 0, %s159
      %s176 = sphi 0, %s160
    $region4: #{tpu_custom_call.1} parent=1 // loop_header_branch
      %20 = sbr.rel (%p18) target = $region8
    $region5: #{tpu_custom_call.1} parent=1 // loop_body
      %s22 = ssub.s32 %s17, 1
      %s23 = ssub.s32 %s17, 2
      %s33 = sadd.s32 1, %s26
      %p34 = scmp.ge.s32.totalorder %s33, 1
      %s35 = scalar_select %p34, 0, %s33
      %s36 = sadd.s32 1, %s25
      %s37 = scalar_select %p34, %s36, %s25
      %p38 = scmp.ge.s32.totalorder %s37, 2
      %s39 = scalar_select %p38, 0, %s37
      %s40 = sadd.s32 1, %s24
      %s41 = scalar_select %p38, %s40, %s24
      %p42 = scmp.ge.s32.totalorder %s41, 1
      %s43 = scalar_select %p42, 0, %s41
      %s44 = ssub.s32 %s24, %s43
      %p45 = scmp.eq.s32.totalorder %s44, 0
      %s47 = sadd.s32 %s46, 1
      %s48 = scalar_select %p45, %s46, %s47
      %p51 = pneg %p45
      %p52 = scmp.eq.s32.totalorder %s17, 1
      %p53 = por %p51, %p52
      %p54 = scmp.ne.s32.totalorder %s46, %s49
      %p55 = scmp.eq.s32.totalorder %s17, 0
      %p56 = por %p54, %p55
      %p57 = scmp.ne.s32.totalorder %s46, %s49
      %p58 = scmp.eq.s32.totalorder %s22, 1
      %p59 = por %p57, %p58
      %p60 = scmp.ne.s32.totalorder %s49, %s50
      %p61 = scmp.eq.s32.totalorder %s22, 0
      %p62 = por %p60, %p61
      %p63 = scmp.ne.s32.totalorder %s49, %s50
      %p64 = scmp.eq.s32.totalorder %s23, 1
      %p65 = por %p63, %p64
      %p67 = scmp.ne.s32.totalorder %s50, %s66
      %p68 = scmp.eq.s32.totalorder %s23, 0
      %p69 = por %p67, %p68
      %s70 = ssub.s32 %s26, %s35
      %s71 = ssub.s32 %s25, %s39
      %s72 = sor.u32 %s70, %s71
      %p73 = scmp.eq.s32.totalorder %s72, 0
      %s75 = sadd.s32 %s74, 1
      %s76 = scalar_select %p73, %s74, %s75
      %p79 = pneg %p73
      %p80 = scmp.eq.s32.totalorder %s17, 1
      %p81 = por %p79, %p80
      %p82 = scmp.ne.s32.totalorder %s74, %s77
      %p83 = scmp.eq.s32.totalorder %s17, 0
      %p84 = por %p82, %p83
      %p85 = scmp.ne.s32.totalorder %s74, %s77
      %p86 = scmp.eq.s32.totalorder %s22, 1
      %p87 = por %p85, %p86
      %p88 = scmp.ne.s32.totalorder %s77, %s78
      %p89 = scmp.eq.s32.totalorder %s22, 0
      %p90 = por %p88, %p89
      %p91 = scmp.ne.s32.totalorder %s77, %s78
      %p92 = scmp.eq.s32.totalorder %s23, 1
      %p93 = por %p91, %p92
      %p95 = scmp.ne.s32.totalorder %s78, %s94
      %p96 = scmp.eq.s32.totalorder %s23, 0
      %p97 = por %p95, %p96
      %s98 = ssub.s32 %s26, %s35
      %s99 = ssub.s32 %s25, %s39
      %s100 = sor.u32 %s98, %s99
      %p101 = scmp.eq.s32.totalorder %s100, 0
      %s103 = sadd.s32 %s102, 1
      %s104 = scalar_select %p101, %s102, %s103
      %p107 = pneg %p101
      %p108 = scmp.eq.s32.totalorder %s17, 1
      %p109 = por %p107, %p108
      %p110 = scmp.ne.s32.totalorder %s102, %s105
      %p111 = scmp.eq.s32.totalorder %s17, 0
      %p112 = por %p110, %p111
      %p113 = scmp.ne.s32.totalorder %s102, %s105
      %p114 = scmp.eq.s32.totalorder %s22, 1
      %p115 = por %p113, %p114
      %p116 = scmp.ne.s32.totalorder %s105, %s106
      %p117 = scmp.eq.s32.totalorder %s22, 0
      %p118 = por %p116, %p117
      %p119 = scmp.ne.s32.totalorder %s105, %s106
      %p120 = scmp.eq.s32.totalorder %s23, 1
      %p121 = por %p119, %p120
      %p123 = scmp.ne.s32.totalorder %s106, %s122
      %p124 = scmp.eq.s32.totalorder %s23, 0
      %p125 = por %p123, %p124
      %s126 = ssub.s32 %s25, %s39
      %p127 = scmp.eq.s32.totalorder %s126, 0
      %s129 = sadd.s32 %s128, 1
      %s130 = scalar_select %p127, %s128, %s129
      %p133 = pneg %p127
      %p134 = scmp.eq.s32.totalorder %s17, 1
      %p135 = por %p133, %p134
      %p136 = scmp.ne.s32.totalorder %s128, %s131
      %p137 = scmp.eq.s32.totalorder %s17, 0
      %p138 = por %p136, %p137
      %p139 = scmp.ne.s32.totalorder %s128, %s131
      %p140 = scmp.eq.s32.totalorder %s22, 1
      %p141 = por %p139, %p140
      %p142 = scmp.ne.s32.totalorder %s131, %s132
      %p143 = scmp.eq.s32.totalorder %s22, 0
      %p144 = por %p142, %p143
      %p145 = scmp.ne.s32.totalorder %s131, %s132
      %p146 = scmp.eq.s32.totalorder %s23, 1
      %p147 = por %p145, %p146
      %p149 = scmp.ne.s32.totalorder %s132, %s148
      %p150 = scmp.eq.s32.totalorder %s23, 0
      %p151 = por %p149, %p150
      %s152 = ssub.s32 %s24, %s43
      %s153 = ssub.s32 %s25, %s39
      %s154 = sor.u32 %s152, %s153
      %p155 = scmp.eq.s32.totalorder %s154, 0
      %s157 = sadd.s32 %s156, 1
      %s158 = scalar_select %p155, %s156, %s157
      %p161 = pneg %p155
      %p162 = scmp.eq.s32.totalorder %s17, 1
      %p163 = por %p161, %p162
      %p164 = scmp.ne.s32.totalorder %s156, %s159
      %p165 = scmp.eq.s32.totalorder %s17, 0
      %p166 = por %p164, %p165
      %p167 = scmp.ne.s32.totalorder %s156, %s159
      %p168 = scmp.eq.s32.totalorder %s22, 1
      %p169 = por %p167, %p168
      %p170 = scmp.ne.s32.totalorder %s159, %s160
      %p171 = scmp.eq.s32.totalorder %s22, 0
      %p172 = por %p170, %p171
      %p173 = scmp.ne.s32.totalorder %s159, %s160
      %p174 = scmp.eq.s32.totalorder %s23, 1
      %p175 = por %p173, %p174
      %p177 = scmp.ne.s32.totalorder %s160, %s176
      %p178 = scmp.eq.s32.totalorder %s23, 0
      %p179 = por %p177, %p178
      %p180 = scmp.le.s32.totalorder 1, %s17
      %p181 = scmp.lt.s32.totalorder %s17, 3
      %p182 = pnand %p180, %p181
      %p183 = pneg %p182
      // Predicated region
      $region9: #{tpu_custom_call.1} parent=5 // pred_check
        _
      $region10: #{tpu_custom_call.1} parent=5 // pred_check_branch
        %185 = sbr.rel (%p182) target = $region12
      $region11: #{tpu_custom_call.1} parent=5 // pred_region
        %s186 = ssub.s32 %s17, 1
        // Predicated region
        $region13: #{tpu_custom_call.1} parent=11 // pred_check
          %p187 = pneg %p62
        $region14: #{tpu_custom_call.1} parent=11 // pred_check_branch
          %189 = sbr.rel (%p187) target = $region16
        $region15: #{tpu_custom_call.1} parent=11 // pred_region
          %s190 = smul.u32 2, %s27
          %s192 = ssub.s32 512, 512
          %193 = vsyncadd [#allocation5], %s192
          %s194 = smul.addr %s190, 2
          %s195 = smul.addr %s194, 128
          %s196 = scalar_lea.hbm %s0, %s195
          %s197 = sshll.u32 [#allocation4], 4
          %s198 = int_to_ptr.vmem [resolvable:$true] %s197
          %203 = dma.hbm_to_vmem [thread:$0]  %s196, 512, %s198, [#allocation5], 256, 256, 16
        $region16: #{tpu_custom_call.1} parent=11 // pred_fallthru
          _
      $region12: #{tpu_custom_call.1} parent=5 // pred_fallthru
        _
      %p204 = scmp.lt.s32.totalorder %s17, 2
      // Predicated region
      $region17: #{tpu_custom_call.1} parent=5 // pred_check
        %p205 = pneg %p204
      $region18: #{tpu_custom_call.1} parent=5 // pred_check_branch
        %207 = sbr.rel (%p205) target = $region20
      $region19: #{tpu_custom_call.1} parent=5 // pred_region
        // Predicated region
        $region21: #{tpu_custom_call.1} parent=19 // pred_check
          %p208 = pneg %p84
        $region22: #{tpu_custom_call.1} parent=19 // pred_check_branch
          %210 = sbr.rel (%p208) target = $region24
        $region23: #{tpu_custom_call.1} parent=19 // pred_region
          %s211 = sand.u32 %s17, 1
          %s212 = scalar_lea.sflag [#allocation8], %s211
          %s213 = sand.u32 %s74, 1
          %s214 = smul.addr %s213, 32
          %s215 = scalar_lea.vmem [#allocation7], %s214
          %s216 = smul.u32 4, %s26
          %s218 = ssub.s32 512, 512
          %219 = vsyncadd %s212, %s218
          %s220 = smul.addr %s216, 2
          %s221 = sadd.s32 %s25, %s220
          %s222 = smul.addr %s221, 128
          %s223 = scalar_lea.hbm %s1, %s222
          %s224 = sshll.u32 %s215, 4
          %s225 = int_to_ptr.vmem [resolvable:$true] %s224
          %230 = dma.hbm_to_vmem [thread:$0]  %s223, 512, %s225, %s212, 256, 128, 8
        $region24: #{tpu_custom_call.1} parent=19 // pred_fallthru
          _
        // Predicated region
        $region25: #{tpu_custom_call.1} parent=19 // pred_check
          %p231 = pneg %p112
        $region26: #{tpu_custom_call.1} parent=19 // pred_check_branch
          %233 = sbr.rel (%p231) target = $region28
        $region27: #{tpu_custom_call.1} parent=19 // pred_region
          %s234 = sand.u32 %s17, 1
          %s235 = scalar_lea.sflag [#allocation8], %s234
          %s236 = sand.u32 %s102, 1
          %s237 = smul.addr %s236, 4
          %s238 = scalar_lea.vmem [#allocation9], %s237
          %s239 = smul.u32 2, %s26
          %s241 = ssub.s32 64, 64
          %242 = vsyncadd %s235, %s241
          %s243 = smul.addr %s239, 2
          %s244 = sadd.s32 %s25, %s243
          %s245 = smul.addr %s244, 32
          %s246 = scalar_lea.hbm %s2, %s245
          %s247 = sshll.u32 %s238, 4
          %s248 = int_to_ptr.vmem [resolvable:$true] %s247
          %253 = dma.hbm_to_vmem [thread:$0]  %s246, 64, %s248, %s235, 64, 32, 2
        $region28: #{tpu_custom_call.1} parent=19 // pred_fallthru
          _
        // Predicated region
        $region29: #{tpu_custom_call.1} parent=19 // pred_check
          %p254 = pneg %p138
        $region30: #{tpu_custom_call.1} parent=19 // pred_check_branch
          %256 = sbr.rel (%p254) target = $region32
        $region31: #{tpu_custom_call.1} parent=19 // pred_region
          %p257 = scmp.lt.s32.totalorder %s25, 1
          %s258 = scalar_select %p257, %s25, 1
          %s259 = scalar_lea.vmem %s3, %s258
        $region32: #{tpu_custom_call.1} parent=19 // pred_fallthru
          _
      $region20: #{tpu_custom_call.1} parent=5 // pred_fallthru
        _
      %p260 = scmp.le.s32.totalorder 1, %s17
      %p261 = scmp.lt.s32.totalorder %s17, 3
      %p262 = pnand %p260, %p261
      %p263 = pneg %p262
      // Predicated region
      $region33: #{tpu_custom_call.1} parent=5 // pred_check
        _
      $region34: #{tpu_custom_call.1} parent=5 // pred_check_branch
        %265 = sbr.rel (%p262) target = $region36
      $region35: #{tpu_custom_call.1} parent=5 // pred_region
        %s266 = ssub.s32 %s17, 1
        // Predicated region
        $region37: #{tpu_custom_call.1} parent=35 // pred_check
          %p267 = pneg %p62
        $region38: #{tpu_custom_call.1} parent=35 // pred_check_branch
          %269 = sbr.rel (%p267) target = $region40
        $region39: #{tpu_custom_call.1} parent=35 // pred_region
          %270 = dma.done [#allocation5], 512
        $region40: #{tpu_custom_call.1} parent=35 // pred_fallthru
          _
        %s271 = sand.u32 %s22, 1
        %s272 = scalar_lea.sflag [#allocation8], %s271
        %s273 = sand.u32 %s77, 1
        %s274 = smul.addr %s273, 32
        %s275 = scalar_lea.vmem [#allocation7], %s274
        // Predicated region
        $region41: #{tpu_custom_call.1} parent=35 // pred_check
          %p276 = pneg %p90
        $region42: #{tpu_custom_call.1} parent=35 // pred_check_branch
          %278 = sbr.rel (%p276) target = $region44
        $region43: #{tpu_custom_call.1} parent=35 // pred_region
          %279 = dma.done %s272, 512
        $region44: #{tpu_custom_call.1} parent=35 // pred_fallthru
          _
        %s280 = sand.u32 %s22, 1
        %s281 = scalar_lea.sflag [#allocation8], %s280
        %s282 = sand.u32 %s105, 1
        %s283 = smul.addr %s282, 4
        %s284 = scalar_lea.vmem [#allocation9], %s283
        // Predicated region
        $region45: #{tpu_custom_call.1} parent=35 // pred_check
          %p285 = pneg %p118
        $region46: #{tpu_custom_call.1} parent=35 // pred_check_branch
          %287 = sbr.rel (%p285) target = $region48
        $region47: #{tpu_custom_call.1} parent=35 // pred_region
          %288 = dma.done %s281, 64
        $region48: #{tpu_custom_call.1} parent=35 // pred_fallthru
          _
        %p289 = pneg %p62
        %p290 = pneg %p59
        %s291 = sand.u32 %s22, 1
        %s292 = scalar_lea.sflag [#allocation8], %s291
        %s293 = sand.u32 %s77, 1
        %s294 = smul.addr %s293, 32
        %s295 = scalar_lea.vmem [#allocation7], %s294
        %p296 = pneg %p90
        %p297 = pneg %p87
        %s298 = sand.u32 %s22, 1
        %s299 = scalar_lea.sflag [#allocation8], %s298
        %s300 = sand.u32 %s105, 1
        %s301 = smul.addr %s300, 4
        %s302 = scalar_lea.vmem [#allocation9], %s301
        %p303 = pneg %p118
        %p304 = pneg %p115
        %p305 = scmp.lt.s32.totalorder %s28, 1
        %s306 = scalar_select %p305, %s28, 1
        %s307 = scalar_lea.vmem %s3, %s306
        %p308 = pneg %p144
        %p309 = pneg %p141
        %p310 = pneg %p172
        %p311 = pneg %p169
        %s312 = sand.u32 %s159, 1
        %s313 = scalar_lea.sflag [#allocation6], %s312
        %s314 = sand.u32 %s159, 1
        %s315 = smul.addr %s314, 16
        %s316 = scalar_lea.vmem [#allocation10], %s315
        %s317 = smul.u32 2, %s27
        %s318 = smul.u32 4, %s29
        %s319 = smul.u32 2, %s29
        %p320 = scmp.lt.s32.totalorder %s28, 1
        %s321 = scalar_select %p320, %s28, 1
        %s322 = scalar_lea.vmem %s3, %s321
        %s323 = smul.u32 2, %s27
        %p324 = scmp.eq.s32.totalorder %s29, 0
        // Predicated region
        $region49: #{tpu_custom_call.1} parent=35 // pred_check
          %p325 = pneg %p324
        $region50: #{tpu_custom_call.1} parent=35 // pred_check_branch
          %327 = sbr.rel (%p325) target = $region52
        $region51: #{tpu_custom_call.1} parent=35 // pred_region
          %v328 = vld [vmem:[%s322] sm:$0x1]
          %v330 = vlaneseq
          %v331 = vshrl.u32 %v330, 7
          %v332 = vsub.s32 0, %v331
          %v333 = vrot.slane %v328, %v332
          %335 = vst [vmem:[#allocation2] sm:$0xff] %v333
          %336 = vst [vmem:[#allocation2 + $0x8] sm:$0xff] %v333
        $region52: #{tpu_custom_call.1} parent=35 // pred_fallthru
          _
        %v337 = vlaneseq
        %v338 = vshrl.u32 %v337, 7
        %v339 = vmul.u32 %v338, 4
        %v340 = vld [vmem:[%s275] sm:$0xff]
        %v341 = vcombine.high %v340, %v340
        %v343 = vunpack.c.l.s4 1966171168
        %v344 = vunpack.c.0.s8 %v343
        %v345 = vlaneseq
        %v346 = vshrl.u32 %v345, 7
        %v347 = vsub.s32 %v344, %v346
        %v348 = vrot.slane %v340, %v347
        %v350 = vunpack.c.l.s4 1966171168
        %v351 = vunpack.c.0.s8 %v350
        %v352 = vlaneseq
        %v353 = vshrl.u32 %v352, 7
        %v354 = vsub.s32 %v351, %v353
        %v355 = vrot.slane %v341, %v354
        %v356 = vcombine.high %v348, %v348
        %v357 = vcombine.high %v355, %v355
        %v359 = vunpack.c.l.s4 1966171168
        %v360 = vunpack.c.0.s8 %v359
        %v361 = vlaneseq
        %v362 = vshrl.u32 %v361, 7
        %v363 = vsub.s32 %v360, %v362
        %v364 = vrot.slane %v348, %v363
        %v366 = vunpack.c.l.s4 1966171168
        %v367 = vunpack.c.0.s8 %v366
        %v368 = vlaneseq
        %v369 = vshrl.u32 %v368, 7
        %v370 = vsub.s32 %v367, %v369
        %v371 = vrot.slane %v355, %v370
        %v373 = vunpack.c.l.s4 1966171168
        %v374 = vunpack.c.0.s8 %v373
        %v375 = vlaneseq
        %v376 = vshrl.u32 %v375, 7
        %v377 = vsub.s32 %v374, %v376
        %v378 = vrot.slane %v356, %v377
        %v380 = vunpack.c.l.s4 1966171168
        %v381 = vunpack.c.0.s8 %v380
        %v382 = vlaneseq
        %v383 = vshrl.u32 %v382, 7
        %v384 = vsub.s32 %v381, %v383
        %v385 = vrot.slane %v357, %v384
        %v386 = vcombine.high %v364, %v364
        %v387 = vcombine.high %v371, %v371
        %v388 = vcombine.high %v378, %v378
        %v389 = vcombine.high %v385, %v385
        %v390 = vlaneseq
        %v391 = vshrl.u32 %v390, 7
        %v392 = vsub.s32 0, %v391
        %v393 = vrot.slane %v364, %v392
        %v394 = vlaneseq
        %v395 = vshrl.u32 %v394, 7
        %v396 = vsub.s32 0, %v395
        %v397 = vrot.slane %v378, %v396
        %v398 = vlaneseq
        %v399 = vshrl.u32 %v398, 7
        %v400 = vsub.s32 0, %v399
        %v401 = vrot.slane %v386, %v400
        %v402 = vlaneseq
        %v403 = vshrl.u32 %v402, 7
        %v404 = vsub.s32 0, %v403
        %v405 = vrot.slane %v388, %v404
        %v406 = vlaneseq
        %v407 = vshrl.u32 %v406, 7
        %v408 = vsub.s32 0, %v407
        %v409 = vrot.slane %v371, %v408
        %v410 = vlaneseq
        %v411 = vshrl.u32 %v410, 7
        %v412 = vsub.s32 0, %v411
        %v413 = vrot.slane %v385, %v412
        %v414 = vlaneseq
        %v415 = vshrl.u32 %v414, 7
        %v416 = vsub.s32 0, %v415
        %v417 = vrot.slane %v387, %v416
        %v418 = vlaneseq
        %v419 = vshrl.u32 %v418, 7
        %v420 = vsub.s32 0, %v419
        %v421 = vrot.slane %v389, %v420
        %v422 = vshra.s32 %v393, %v339
        %v423 = vshra.s32 %v397, %v339
        %v424 = vshra.s32 %v401, %v339
        %v425 = vshra.s32 %v405, %v339
        %v426 = vshra.s32 %v409, %v339
        %v427 = vshra.s32 %v413, %v339
        %v428 = vshra.s32 %v417, %v339
        %v429 = vshra.s32 %v421, %v339
        %v430 = vand.u32 %v422, 15
        %v431 = vand.u32 %v423, 15
        %v432 = vand.u32 %v424, 15
        %v433 = vand.u32 %v425, 15
        %v434 = vand.u32 %v426, 15
        %v435 = vand.u32 %v427, 15
        %v436 = vand.u32 %v428, 15
        %v437 = vand.u32 %v429, 15
        %v438 = vcvt.s32.f32 %v430
        %v439 = vcvt.s32.f32 %v431
        %v440 = vcvt.s32.f32 %v432
        %v441 = vcvt.s32.f32 %v433
        %v442 = vcvt.s32.f32 %v434
        %v443 = vcvt.s32.f32 %v435
        %v444 = vcvt.s32.f32 %v436
        %v445 = vcvt.s32.f32 %v437
        %446 = vst [vmem:[#allocation3] sm:$0xff] %v438
        %447 = vst [vmem:[#allocation3 + $0x8] sm:$0xff] %v439
        %448 = vst [vmem:[#allocation3 + $0x10] sm:$0xff] %v440
        %449 = vst [vmem:[#allocation3 + $0x18] sm:$0xff] %v441
        %450 = vst [vmem:[#allocation3 + $0x20] sm:$0xff] %v442
        %451 = vst [vmem:[#allocation3 + $0x28] sm:$0xff] %v443
        %452 = vst [vmem:[#allocation3 + $0x30] sm:$0xff] %v444
        %453 = vst [vmem:[#allocation3 + $0x38] sm:$0xff] %v445
        %v454 = vld [vmem:[%s275 + $0x8] sm:$0xff]
        %v455 = vcombine.high %v454, %v454
        %v457 = vunpack.c.l.s4 1966171168
        %v458 = vunpack.c.0.s8 %v457
        %v459 = vlaneseq
        %v460 = vshrl.u32 %v459, 7
        %v461 = vsub.s32 %v458, %v460
        %v462 = vrot.slane %v454, %v461
        %v464 = vunpack.c.l.s4 1966171168
        %v465 = vunpack.c.0.s8 %v464
        %v466 = vlaneseq
        %v467 = vshrl.u32 %v466, 7
        %v468 = vsub.s32 %v465, %v467
        %v469 = vrot.slane %v455, %v468
        %v470 = vcombine.high %v462, %v462
        %v471 = vcombine.high %v469, %v469
        %v473 = vunpack.c.l.s4 1966171168
        %v474 = vunpack.c.0.s8 %v473
        %v475 = vlaneseq
        %v476 = vshrl.u32 %v475, 7
        %v477 = vsub.s32 %v474, %v476
        %v478 = vrot.slane %v462, %v477
        %v480 = vunpack.c.l.s4 1966171168
        %v481 = vunpack.c.0.s8 %v480
        %v482 = vlaneseq
        %v483 = vshrl.u32 %v482, 7
        %v484 = vsub.s32 %v481, %v483
        %v485 = vrot.slane %v469, %v484
        %v487 = vunpack.c.l.s4 1966171168
        %v488 = vunpack.c.0.s8 %v487
        %v489 = vlaneseq
        %v490 = vshrl.u32 %v489, 7
        %v491 = vsub.s32 %v488, %v490
        %v492 = vrot.slane %v470, %v491
        %v494 = vunpack.c.l.s4 1966171168
        %v495 = vunpack.c.0.s8 %v494
        %v496 = vlaneseq
        %v497 = vshrl.u32 %v496, 7
        %v498 = vsub.s32 %v495, %v497
        %v499 = vrot.slane %v471, %v498
        %v500 = vcombine.high %v478, %v478
        %v501 = vcombine.high %v485, %v485
        %v502 = vcombine.high %v492, %v492
        %v503 = vcombine.high %v499, %v499
        %v504 = vlaneseq
        %v505 = vshrl.u32 %v504, 7
        %v506 = vsub.s32 0, %v505
        %v507 = vrot.slane %v478, %v506
        %v508 = vlaneseq
        %v509 = vshrl.u32 %v508, 7
        %v510 = vsub.s32 0, %v509
        %v511 = vrot.slane %v492, %v510
        %v512 = vlaneseq
        %v513 = vshrl.u32 %v512, 7
        %v514 = vsub.s32 0, %v513
        %v515 = vrot.slane %v500, %v514
        %v516 = vlaneseq
        %v517 = vshrl.u32 %v516, 7
        %v518 = vsub.s32 0, %v517
        %v519 = vrot.slane %v502, %v518
        %v520 = vlaneseq
        %v521 = vshrl.u32 %v520, 7
        %v522 = vsub.s32 0, %v521
        %v523 = vrot.slane %v485, %v522
        %v524 = vlaneseq
        %v525 = vshrl.u32 %v524, 7
        %v526 = vsub.s32 0, %v525
        %v527 = vrot.slane %v499, %v526
        %v528 = vlaneseq
        %v529 = vshrl.u32 %v528, 7
        %v530 = vsub.s32 0, %v529
        %v531 = vrot.slane %v501, %v530
        %v532 = vlaneseq
        %v533 = vshrl.u32 %v532, 7
        %v534 = vsub.s32 0, %v533
        %v535 = vrot.slane %v503, %v534
        %v536 = vshra.s32 %v507, %v339
        %v537 = vshra.s32 %v511, %v339
        %v538 = vshra.s32 %v515, %v339
        %v539 = vshra.s32 %v519, %v339
        %v540 = vshra.s32 %v523, %v339
        %v541 = vshra.s32 %v527, %v339
        %v542 = vshra.s32 %v531, %v339
        %v543 = vshra.s32 %v535, %v339
        %v544 = vand.u32 %v536, 15
        %v545 = vand.u32 %v537, 15
        %v546 = vand.u32 %v538, 15
        %v547 = vand.u32 %v539, 15
        %v548 = vand.u32 %v540, 15
        %v549 = vand.u32 %v541, 15
        %v550 = vand.u32 %v542, 15
        %v551 = vand.u32 %v543, 15
        %v552 = vcvt.s32.f32 %v544
        %v553 = vcvt.s32.f32 %v545
        %v554 = vcvt.s32.f32 %v546
        %v555 = vcvt.s32.f32 %v547
        %v556 = vcvt.s32.f32 %v548
        %v557 = vcvt.s32.f32 %v549
        %v558 = vcvt.s32.f32 %v550
        %v559 = vcvt.s32.f32 %v551
        %560 = vst [vmem:[#allocation3 + $0x40] sm:$0xff] %v552
        %561 = vst [vmem:[#allocation3 + $0x48] sm:$0xff] %v553
        %562 = vst [vmem:[#allocation3 + $0x50] sm:$0xff] %v554
        %563 = vst [vmem:[#allocation3 + $0x58] sm:$0xff] %v555
        %564 = vst [vmem:[#allocation3 + $0x60] sm:$0xff] %v556
        %565 = vst [vmem:[#allocation3 + $0x68] sm:$0xff] %v557
        %566 = vst [vmem:[#allocation3 + $0x70] sm:$0xff] %v558
        %567 = vst [vmem:[#allocation3 + $0x78] sm:$0xff] %v559
        %v568 = vld [vmem:[%s284] sm:$0x1]
        %v569 = vld [vmem:[%s284 + $0x1] sm:$0x1]
        %s570 = smul.u32 %s29, 256
        %s571 = sshra.s32 %s570, 7
        %s572 = sand.u32 %s570, 127
        %s573 = smul.addr %s571, 8
        %s574 = scalar_lea.vmem [#allocation4], %s573
        %v575 = vld [vmem:[%s574] sm:$0xff]
        %v576 = vld [vmem:[%s574 + $0x10] sm:$0xff]
        %v577 = vld [vmem:[#allocation3] sm:$0xff]
        %v578 = vld [vmem:[#allocation3 + $0x8] sm:$0xff]
        %v579 = vld [vmem:[#allocation3 + $0x10] sm:$0xff]
        %v580 = vld [vmem:[#allocation3 + $0x18] sm:$0xff]
        %v581 = vld [vmem:[#allocation3 + $0x20] sm:$0xff]
        %v582 = vld [vmem:[#allocation3 + $0x28] sm:$0xff]
        %v583 = vld [vmem:[#allocation3 + $0x30] sm:$0xff]
        %v584 = vld [vmem:[#allocation3 + $0x38] sm:$0xff]
        %v585 = vld [vmem:[#allocation3 + $0x40] sm:$0xff]
        %v586 = vld [vmem:[#allocation3 + $0x48] sm:$0xff]
        %v587 = vld [vmem:[#allocation3 + $0x50] sm:$0xff]
        %v588 = vld [vmem:[#allocation3 + $0x58] sm:$0xff]
        %v589 = vld [vmem:[#allocation3 + $0x60] sm:$0xff]
        %v590 = vld [vmem:[#allocation3 + $0x68] sm:$0xff]
        %v591 = vld [vmem:[#allocation3 + $0x70] sm:$0xff]
        %v592 = vld [vmem:[#allocation3 + $0x78] sm:$0xff]
        %593 = vmatprep.subr.mxu0 0.0
        %594 = vmatpush1.msra.mxu0 %v592
        %595 = vmatprep.subr.mxu0 0.0
        %596 = vmatpush1.msra.mxu0 %v591
        %597 = vmatprep.subr.mxu0 0.0
        %598 = vmatpush1.msra.mxu0 %v590
        %599 = vmatprep.subr.mxu0 0.0
        %600 = vmatpush1.msra.mxu0 %v589
        %601 = vmatprep.subr.mxu0 0.0
        %602 = vmatpush1.msra.mxu0 %v588
        %603 = vmatprep.subr.mxu0 0.0
        %604 = vmatpush1.msra.mxu0 %v587
        %605 = vmatprep.subr.mxu0 0.0
        %606 = vmatpush1.msra.mxu0 %v586
        %607 = vmatprep.subr.mxu0 0.0
        %608 = vmatpush1.msra.mxu0 %v585
        %609 = vmatprep.subr.mxu0 0.0
        %610 = vmatpush1.msra.mxu0 %v584
        %611 = vmatprep.subr.mxu0 0.0
        %612 = vmatpush1.msra.mxu0 %v583
        %613 = vmatprep.subr.mxu0 0.0
        %614 = vmatpush1.msra.mxu0 %v582
        %615 = vmatprep.subr.mxu0 0.0
        %616 = vmatpush1.msra.mxu0 %v581
        %617 = vmatprep.subr.mxu0 0.0
        %618 = vmatpush1.msra.mxu0 %v580
        %619 = vmatprep.subr.mxu0 0.0
        %620 = vmatpush1.msra.mxu0 %v579
        %621 = vmatprep.subr.mxu0 0.0
        %622 = vmatpush1.msra.mxu0 %v578
        %623 = vmatprep.subr.mxu0 0.0
        %624 = vmatpush1.msra.mxu0 %v577
        %625 = vmatprep.subr.mxu0 0.0
        %626 = vmatpush2.msra.mxu0 0.0
        %627 = vmatprep.subr.mxu0 0.0
        %628 = vmatpush2.msra.mxu0 0.0
        %629 = vmatprep.subr.mxu0 0.0
        %630 = vmatpush2.msra.mxu0 0.0
        %631 = vmatprep.subr.mxu0 0.0
        %632 = vmatpush2.msra.mxu0 0.0
        %633 = vmatprep.subr.mxu0 0.0
        %634 = vmatpush2.msra.mxu0 0.0
        %635 = vmatprep.subr.mxu0 0.0
        %636 = vmatpush2.msra.mxu0 0.0
        %637 = vmatprep.subr.mxu0 0.0
        %638 = vmatpush2.msra.mxu0 0.0
        %639 = vmatprep.subr.mxu0 0.0
        %640 = vmatpush2.msra.mxu0 0.0
        %641 = vmatprep.subr.mxu0 0.0
        %642 = vmatpush2.msra.mxu0 0.0
        %643 = vmatprep.subr.mxu0 0.0
        %644 = vmatpush2.msra.mxu0 0.0
        %645 = vmatprep.subr.mxu0 0.0
        %646 = vmatpush2.msra.mxu0 0.0
        %647 = vmatprep.subr.mxu0 0.0
        %648 = vmatpush2.msra.mxu0 0.0
        %649 = vmatprep.subr.mxu0 0.0
        %650 = vmatpush2.msra.mxu0 0.0
        %651 = vmatprep.subr.mxu0 0.0
        %652 = vmatpush2.msra.mxu0 0.0
        %653 = vmatprep.subr.mxu0 0.0
        %654 = vmatpush2.msra.mxu0 0.0
        %655 = vmatprep.subr.mxu0 0.0
        %656 = vmatpush2.msra.mxu0 0.0
        %657 = vmatprep.mubr.f32.mxu0 0.0
        %658 = vmatmul.mubr.f32.gmra.mxu0 %v575
        %v659 = vpop.f32.mrf.mxu0
        %v660 = vadd.f32 0.0, %v659
        %v661 = vpop.f32.mrf.mxu0
        %662 = vmatprep.mubr.f32.mxu0 0.0
        %663 = vmatmul.mubr.f32.gmra.mxu0 %v576
        %v664 = vpop.f32.mrf.mxu0
        %v665 = vadd.f32 0.0, %v664
        %v666 = vpop.f32.mrf.mxu0
        %667 = vdwg.mxu0
        %668 = vadd.xlane.f32.xlu0 %v575
        %v669 = vpop.xlane.xlu0 %668
        %670 = vadd.xlane.f32.xlu0 %v576
        %v671 = vpop.xlane.xlu0 %670
        %v672 = vld [vmem:[#allocation2] sm:$0xff]
        %v673 = vld [vmem:[#allocation2 + $0x8] sm:$0xff]
        %v674 = vlaneseq
        %v675 = vshrl.u32 %v674, 7
        %v676 = vsub.s32 0, %v675
        %v677 = vrot.slane %v568, %v676
        %v678 = vmul.f32 %v677, %v660
        %v679 = vmul.f32 %v677, %v665
        %v680 = vlaneseq
        %v681 = vshrl.u32 %v680, 7
        %v682 = vsub.s32 0, %v681
        %v683 = vrot.slane %v569, %v682
        %v684 = vmul.f32 %v669, %v683
        %v685 = vmul.f32 %v671, %v683
        %v686 = vsub.f32 %v678, %v684
        %v687 = vsub.f32 %v679, %v685
        %v688 = vadd.f32 %v672, %v686
        %v689 = vadd.f32 %v673, %v687
        %690 = vst [vmem:[#allocation2] sm:$0xff] %v688
        %691 = vst [vmem:[#allocation2 + $0x8] sm:$0xff] %v689
        %v692 = vld [vmem:[%s275 + $0x10] sm:$0xff]
        %v693 = vcombine.high %v692, %v692
        %v695 = vunpack.c.l.s4 1966171168
        %v696 = vunpack.c.0.s8 %v695
        %v697 = vlaneseq
        %v698 = vshrl.u32 %v697, 7
        %v699 = vsub.s32 %v696, %v698
        %v700 = vrot.slane %v692, %v699
        %v702 = vunpack.c.l.s4 1966171168
        %v703 = vunpack.c.0.s8 %v702
        %v704 = vlaneseq
        %v705 = vshrl.u32 %v704, 7
        %v706 = vsub.s32 %v703, %v705
        %v707 = vrot.slane %v693, %v706
        %v708 = vcombine.high %v700, %v700
        %v709 = vcombine.high %v707, %v707
        %v711 = vunpack.c.l.s4 1966171168
        %v712 = vunpack.c.0.s8 %v711
        %v713 = vlaneseq
        %v714 = vshrl.u32 %v713, 7
        %v715 = vsub.s32 %v712, %v714
        %v716 = vrot.slane %v700, %v715
        %v718 = vunpack.c.l.s4 1966171168
        %v719 = vunpack.c.0.s8 %v718
        %v720 = vlaneseq
        %v721 = vshrl.u32 %v720, 7
        %v722 = vsub.s32 %v719, %v721
        %v723 = vrot.slane %v707, %v722
        %v725 = vunpack.c.l.s4 1966171168
        %v726 = vunpack.c.0.s8 %v725
        %v727 = vlaneseq
        %v728 = vshrl.u32 %v727, 7
        %v729 = vsub.s32 %v726, %v728
        %v730 = vrot.slane %v708, %v729
        %v732 = vunpack.c.l.s4 1966171168
        %v733 = vunpack.c.0.s8 %v732
        %v734 = vlaneseq
        %v735 = vshrl.u32 %v734, 7
        %v736 = vsub.s32 %v733, %v735
        %v737 = vrot.slane %v709, %v736
        %v738 = vcombine.high %v716, %v716
        %v739 = vcombine.high %v723, %v723
        %v740 = vcombine.high %v730, %v730
        %v741 = vcombine.high %v737, %v737
        %v742 = vlaneseq
        %v743 = vshrl.u32 %v742, 7
        %v744 = vsub.s32 0, %v743
        %v745 = vrot.slane %v716, %v744
        %v746 = vlaneseq
        %v747 = vshrl.u32 %v746, 7
        %v748 = vsub.s32 0, %v747
        %v749 = vrot.slane %v730, %v748
        %v750 = vlaneseq
        %v751 = vshrl.u32 %v750, 7
        %v752 = vsub.s32 0, %v751
        %v753 = vrot.slane %v738, %v752
        %v754 = vlaneseq
        %v755 = vshrl.u32 %v754, 7
        %v756 = vsub.s32 0, %v755
        %v757 = vrot.slane %v740, %v756
        %v758 = vlaneseq
        %v759 = vshrl.u32 %v758, 7
        %v760 = vsub.s32 0, %v759
        %v761 = vrot.slane %v723, %v760
        %v762 = vlaneseq
        %v763 = vshrl.u32 %v762, 7
        %v764 = vsub.s32 0, %v763
        %v765 = vrot.slane %v737, %v764
        %v766 = vlaneseq
        %v767 = vshrl.u32 %v766, 7
        %v768 = vsub.s32 0, %v767
        %v769 = vrot.slane %v739, %v768
        %v770 = vlaneseq
        %v771 = vshrl.u32 %v770, 7
        %v772 = vsub.s32 0, %v771
        %v773 = vrot.slane %v741, %v772
        %v774 = vshra.s32 %v745, %v339
        %v775 = vshra.s32 %v749, %v339
        %v776 = vshra.s32 %v753, %v339
        %v777 = vshra.s32 %v757, %v339
        %v778 = vshra.s32 %v761, %v339
        %v779 = vshra.s32 %v765, %v339
        %v780 = vshra.s32 %v769, %v339
        %v781 = vshra.s32 %v773, %v339
        %v782 = vand.u32 %v774, 15
        %v783 = vand.u32 %v775, 15
        %v784 = vand.u32 %v776, 15
        %v785 = vand.u32 %v777, 15
        %v786 = vand.u32 %v778, 15
        %v787 = vand.u32 %v779, 15
        %v788 = vand.u32 %v780, 15
        %v789 = vand.u32 %v781, 15
        %v790 = vcvt.s32.f32 %v782
        %v791 = vcvt.s32.f32 %v783
        %v792 = vcvt.s32.f32 %v784
        %v793 = vcvt.s32.f32 %v785
        %v794 = vcvt.s32.f32 %v786
        %v795 = vcvt.s32.f32 %v787
        %v796 = vcvt.s32.f32 %v788
        %v797 = vcvt.s32.f32 %v789
        %s798 = scalar_lea.vmem [#allocation3], 128
        %799 = vst [vmem:[%s798] sm:$0xff] %v790
        %800 = vst [vmem:[%s798 + $0x8] sm:$0xff] %v791
        %801 = vst [vmem:[%s798 + $0x10] sm:$0xff] %v792
        %802 = vst [vmem:[%s798 + $0x18] sm:$0xff] %v793
        %803 = vst [vmem:[%s798 + $0x20] sm:$0xff] %v794
        %804 = vst [vmem:[%s798 + $0x28] sm:$0xff] %v795
        %805 = vst [vmem:[%s798 + $0x30] sm:$0xff] %v796
        %806 = vst [vmem:[%s798 + $0x38] sm:$0xff] %v797
        %v807 = vld [vmem:[%s275 + $0x18] sm:$0xff]
        %v808 = vcombine.high %v807, %v807
        %v810 = vunpack.c.l.s4 1966171168
        %v811 = vunpack.c.0.s8 %v810
        %v812 = vlaneseq
        %v813 = vshrl.u32 %v812, 7
        %v814 = vsub.s32 %v811, %v813
        %v815 = vrot.slane %v807, %v814
        %v817 = vunpack.c.l.s4 1966171168
        %v818 = vunpack.c.0.s8 %v817
        %v819 = vlaneseq
        %v820 = vshrl.u32 %v819, 7
        %v821 = vsub.s32 %v818, %v820
        %v822 = vrot.slane %v808, %v821
        %v823 = vcombine.high %v815, %v815
        %v824 = vcombine.high %v822, %v822
        %v826 = vunpack.c.l.s4 1966171168
        %v827 = vunpack.c.0.s8 %v826
        %v828 = vlaneseq
        %v829 = vshrl.u32 %v828, 7
        %v830 = vsub.s32 %v827, %v829
        %v831 = vrot.slane %v815, %v830
        %v833 = vunpack.c.l.s4 1966171168
        %v834 = vunpack.c.0.s8 %v833
        %v835 = vlaneseq
        %v836 = vshrl.u32 %v835, 7
        %v837 = vsub.s32 %v834, %v836
        %v838 = vrot.slane %v822, %v837
        %v840 = vunpack.c.l.s4 1966171168
        %v841 = vunpack.c.0.s8 %v840
        %v842 = vlaneseq
        %v843 = vshrl.u32 %v842, 7
        %v844 = vsub.s32 %v841, %v843
        %v845 = vrot.slane %v823, %v844
        %v847 = vunpack.c.l.s4 1966171168
        %v848 = vunpack.c.0.s8 %v847
        %v849 = vlaneseq
        %v850 = vshrl.u32 %v849, 7
        %v851 = vsub.s32 %v848, %v850
        %v852 = vrot.slane %v824, %v851
        %v853 = vcombine.high %v831, %v831
        %v854 = vcombine.high %v838, %v838
        %v855 = vcombine.high %v845, %v845
        %v856 = vcombine.high %v852, %v852
        %v857 = vlaneseq
        %v858 = vshrl.u32 %v857, 7
        %v859 = vsub.s32 0, %v858
        %v860 = vrot.slane %v831, %v859
        %v861 = vlaneseq
        %v862 = vshrl.u32 %v861, 7
        %v863 = vsub.s32 0, %v862
        %v864 = vrot.slane %v845, %v863
        %v865 = vlaneseq
        %v866 = vshrl.u32 %v865, 7
        %v867 = vsub.s32 0, %v866
        %v868 = vrot.slane %v853, %v867
        %v869 = vlaneseq
        %v870 = vshrl.u32 %v869, 7
        %v871 = vsub.s32 0, %v870
        %v872 = vrot.slane %v855, %v871
        %v873 = vlaneseq
        %v874 = vshrl.u32 %v873, 7
        %v875 = vsub.s32 0, %v874
        %v876 = vrot.slane %v838, %v875
        %v877 = vlaneseq
        %v878 = vshrl.u32 %v877, 7
        %v879 = vsub.s32 0, %v878
        %v880 = vrot.slane %v852, %v879
        %v881 = vlaneseq
        %v882 = vshrl.u32 %v881, 7
        %v883 = vsub.s32 0, %v882
        %v884 = vrot.slane %v854, %v883
        %v885 = vlaneseq
        %v886 = vshrl.u32 %v885, 7
        %v887 = vsub.s32 0, %v886
        %v888 = vrot.slane %v856, %v887
        %v889 = vshra.s32 %v860, %v339
        %v890 = vshra.s32 %v864, %v339
        %v891 = vshra.s32 %v868, %v339
        %v892 = vshra.s32 %v872, %v339
        %v893 = vshra.s32 %v876, %v339
        %v894 = vshra.s32 %v880, %v339
        %v895 = vshra.s32 %v884, %v339
        %v896 = vshra.s32 %v888, %v339
        %v897 = vand.u32 %v889, 15
        %v898 = vand.u32 %v890, 15
        %v899 = vand.u32 %v891, 15
        %v900 = vand.u32 %v892, 15
        %v901 = vand.u32 %v893, 15
        %v902 = vand.u32 %v894, 15
        %v903 = vand.u32 %v895, 15
        %v904 = vand.u32 %v896, 15
        %v905 = vcvt.s32.f32 %v897
        %v906 = vcvt.s32.f32 %v898
        %v907 = vcvt.s32.f32 %v899
        %v908 = vcvt.s32.f32 %v900
        %v909 = vcvt.s32.f32 %v901
        %v910 = vcvt.s32.f32 %v902
        %v911 = vcvt.s32.f32 %v903
        %v912 = vcvt.s32.f32 %v904
        %913 = vst [vmem:[%s798 + $0x40] sm:$0xff] %v905
        %914 = vst [vmem:[%s798 + $0x48] sm:$0xff] %v906
        %915 = vst [vmem:[%s798 + $0x50] sm:$0xff] %v907
        %916 = vst [vmem:[%s798 + $0x58] sm:$0xff] %v908
        %917 = vst [vmem:[%s798 + $0x60] sm:$0xff] %v909
        %918 = vst [vmem:[%s798 + $0x68] sm:$0xff] %v910
        %919 = vst [vmem:[%s798 + $0x70] sm:$0xff] %v911
        %920 = vst [vmem:[%s798 + $0x78] sm:$0xff] %v912
        %s921 = scalar_lea.vmem %s284, 2 [#allocation9]
        %v922 = vld [vmem:[%s921] sm:$0x1]
        %v923 = vld [vmem:[%s921 + $0x1] sm:$0x1]
        %s924 = sadd.s32 %s570, 128
        %s925 = sshra.s32 %s924, 7
        %s926 = sand.u32 %s924, 127
        %s927 = smul.addr %s925, 8
        %s928 = scalar_lea.vmem [#allocation4], %s927
        %v929 = vld [vmem:[%s928] sm:$0xff]
        %v930 = vld [vmem:[%s928 + $0x10] sm:$0xff]
        %v931 = vld [vmem:[%s798] sm:$0xff]
        %v932 = vld [vmem:[%s798 + $0x8] sm:$0xff]
        %v933 = vld [vmem:[%s798 + $0x10] sm:$0xff]
        %v934 = vld [vmem:[%s798 + $0x18] sm:$0xff]
        %v935 = vld [vmem:[%s798 + $0x20] sm:$0xff]
        %v936 = vld [vmem:[%s798 + $0x28] sm:$0xff]
        %v937 = vld [vmem:[%s798 + $0x30] sm:$0xff]
        %v938 = vld [vmem:[%s798 + $0x38] sm:$0xff]
        %v939 = vld [vmem:[%s798 + $0x40] sm:$0xff]
        %v940 = vld [vmem:[%s798 + $0x48] sm:$0xff]
        %v941 = vld [vmem:[%s798 + $0x50] sm:$0xff]
        %v942 = vld [vmem:[%s798 + $0x58] sm:$0xff]
        %v943 = vld [vmem:[%s798 + $0x60] sm:$0xff]
        %v944 = vld [vmem:[%s798 + $0x68] sm:$0xff]
        %v945 = vld [vmem:[%s798 + $0x70] sm:$0xff]
        %v946 = vld [vmem:[%s798 + $0x78] sm:$0xff]
        %947 = vmatprep.subr.mxu0 0.0
        %948 = vmatpush1.msra.mxu0 %v946
        %949 = vmatprep.subr.mxu0 0.0
        %950 = vmatpush1.msra.mxu0 %v945
        %951 = vmatprep.subr.mxu0 0.0
        %952 = vmatpush1.msra.mxu0 %v944
        %953 = vmatprep.subr.mxu0 0.0
        %954 = vmatpush1.msra.mxu0 %v943
        %955 = vmatprep.subr.mxu0 0.0
        %956 = vmatpush1.msra.mxu0 %v942
        %957 = vmatprep.subr.mxu0 0.0
        %958 = vmatpush1.msra.mxu0 %v941
        %959 = vmatprep.subr.mxu0 0.0
        %960 = vmatpush1.msra.mxu0 %v940
        %961 = vmatprep.subr.mxu0 0.0
        %962 = vmatpush1.msra.mxu0 %v939
        %963 = vmatprep.subr.mxu0 0.0
        %964 = vmatpush1.msra.mxu0 %v938
        %965 = vmatprep.subr.mxu0 0.0
        %966 = vmatpush1.msra.mxu0 %v937
        %967 = vmatprep.subr.mxu0 0.0
        %968 = vmatpush1.msra.mxu0 %v936
        %969 = vmatprep.subr.mxu0 0.0
        %970 = vmatpush1.msra.mxu0 %v935
        %971 = vmatprep.subr.mxu0 0.0
        %972 = vmatpush1.msra.mxu0 %v934
        %973 = vmatprep.subr.mxu0 0.0
        %974 = vmatpush1.msra.mxu0 %v933
        %975 = vmatprep.subr.mxu0 0.0
        %976 = vmatpush1.msra.mxu0 %v932
        %977 = vmatprep.subr.mxu0 0.0
        %978 = vmatpush1.msra.mxu0 %v931
        %979 = vmatprep.subr.mxu0 0.0
        %980 = vmatpush2.msra.mxu0 0.0
        %981 = vmatprep.subr.mxu0 0.0
        %982 = vmatpush2.msra.mxu0 0.0
        %983 = vmatprep.subr.mxu0 0.0
        %984 = vmatpush2.msra.mxu0 0.0
        %985 = vmatprep.subr.mxu0 0.0
        %986 = vmatpush2.msra.mxu0 0.0
        %987 = vmatprep.subr.mxu0 0.0
        %988 = vmatpush2.msra.mxu0 0.0
        %989 = vmatprep.subr.mxu0 0.0
        %990 = vmatpush2.msra.mxu0 0.0
        %991 = vmatprep.subr.mxu0 0.0
        %992 = vmatpush2.msra.mxu0 0.0
        %993 = vmatprep.subr.mxu0 0.0
        %994 = vmatpush2.msra.mxu0 0.0
        %995 = vmatprep.subr.mxu0 0.0
        %996 = vmatpush2.msra.mxu0 0.0
        %997 = vmatprep.subr.mxu0 0.0
        %998 = vmatpush2.msra.mxu0 0.0
        %999 = vmatprep.subr.mxu0 0.0
        %1000 = vmatpush2.msra.mxu0 0.0
        %1001 = vmatprep.subr.mxu0 0.0
        %1002 = vmatpush2.msra.mxu0 0.0
        %1003 = vmatprep.subr.mxu0 0.0
        %1004 = vmatpush2.msra.mxu0 0.0
        %1005 = vmatprep.subr.mxu0 0.0
        %1006 = vmatpush2.msra.mxu0 0.0
        %1007 = vmatprep.subr.mxu0 0.0
        %1008 = vmatpush2.msra.mxu0 0.0
        %1009 = vmatprep.subr.mxu0 0.0
        %1010 = vmatpush2.msra.mxu0 0.0
        %1011 = vmatprep.mubr.f32.mxu0 0.0
        %1012 = vmatmul.mubr.f32.gmra.mxu0 %v929
        %v1013 = vpop.f32.mrf.mxu0
        %v1014 = vadd.f32 0.0, %v1013
        %v1015 = vpop.f32.mrf.mxu0
        %1016 = vmatprep.mubr.f32.mxu0 0.0
        %1017 = vmatmul.mubr.f32.gmra.mxu0 %v930
        %v1018 = vpop.f32.mrf.mxu0
        %v1019 = vadd.f32 0.0, %v1018
        %v1020 = vpop.f32.mrf.mxu0
        %1021 = vdwg.mxu0
        %1022 = vadd.xlane.f32.xlu0 %v929
        %v1023 = vpop.xlane.xlu0 %1022
        %1024 = vadd.xlane.f32.xlu0 %v930
        %v1025 = vpop.xlane.xlu0 %1024
        %v1026 = vld [vmem:[#allocation2] sm:$0xff]
        %v1027 = vld [vmem:[#allocation2 + $0x8] sm:$0xff]
        %v1028 = vlaneseq
        %v1029 = vshrl.u32 %v1028, 7
        %v1030 = vsub.s32 0, %v1029
        %v1031 = vrot.slane %v922, %v1030
        %v1032 = vmul.f32 %v1031, %v1014
        %v1033 = vmul.f32 %v1031, %v1019
        %v1034 = vlaneseq
        %v1035 = vshrl.u32 %v1034, 7
        %v1036 = vsub.s32 0, %v1035
        %v1037 = vrot.slane %v923, %v1036
        %v1038 = vmul.f32 %v1023, %v1037
        %v1039 = vmul.f32 %v1025, %v1037
        %v1040 = vsub.f32 %v1032, %v1038
        %v1041 = vsub.f32 %v1033, %v1039
        %v1042 = vadd.f32 %v1026, %v1040
        %v1043 = vadd.f32 %v1027, %v1041
        %1044 = vst [vmem:[#allocation2] sm:$0xff] %v1042
        %1045 = vst [vmem:[#allocation2 + $0x8] sm:$0xff] %v1043
        // Predicated region
        $region53: #{tpu_custom_call.1} parent=35 // pred_check
          %p1046 = pneg %p324
        $region54: #{tpu_custom_call.1} parent=35 // pred_check_branch
          %1048 = sbr.rel (%p1046) target = $region56
        $region55: #{tpu_custom_call.1} parent=35 // pred_region
          %v1049 = vld [vmem:[#allocation2] sm:$0xff]
          %v1050 = vld [vmem:[#allocation2 + $0x8] sm:$0xff]
          %1051 = vst [vmem:[%s316] sm:$0xff] %v1049
          %1052 = vst [vmem:[%s316 + $0x8] sm:$0xff] %v1050
        $region56: #{tpu_custom_call.1} parent=35 // pred_fallthru
          _
        %s1053 = sand.u32 %s159, 1
        %s1054 = scalar_lea.sflag [#allocation6], %s1053
        %s1055 = sand.u32 %s159, 1
        %s1056 = smul.addr %s1055, 16
        %s1057 = scalar_lea.vmem [#allocation10], %s1056
        // Predicated region
        $region57: #{tpu_custom_call.1} parent=35 // pred_check
          %p1058 = pneg %p169
        $region58: #{tpu_custom_call.1} parent=35 // pred_check_branch
          %1060 = sbr.rel (%p1058) target = $region60
        $region59: #{tpu_custom_call.1} parent=35 // pred_region
          %s1061 = smul.u32 2, %s27
          %s1063 = ssub.s32 256, 256
          %1064 = vsyncadd %s1054, %s1063
          %s1065 = smul.addr %s1061, 2
          %s1066 = sadd.s32 %s28, %s1065
          %s1067 = smul.addr %s1066, 128
          %s1068 = scalar_lea.hbm %s4, %s1067
          %s1069 = sshll.u32 %s1057, 4
          %s1070 = int_to_ptr.vmem [resolvable:$true] %s1069
          %1075 = dma.vmem_to_hbm [thread:$0]  %s1070, 256, %s1068, %s1054, 128, 256, 8
        $region60: #{tpu_custom_call.1} parent=35 // pred_fallthru
          _
      $region36: #{tpu_custom_call.1} parent=5 // pred_fallthru
        _
      %p1076 = scmp.le.s32.totalorder 2, %s17
      // Predicated region
      $region61: #{tpu_custom_call.1} parent=5 // pred_check
        %p1077 = pneg %p1076
      $region62: #{tpu_custom_call.1} parent=5 // pred_check_branch
        %1079 = sbr.rel (%p1077) target = $region64
      $region63: #{tpu_custom_call.1} parent=5 // pred_region
        %s1080 = ssub.s32 %s17, 2
        // Predicated region
        $region65: #{tpu_custom_call.1} parent=63 // pred_check
          %p1081 = pneg %p175
        $region66: #{tpu_custom_call.1} parent=63 // pred_check_branch
          %1083 = sbr.rel (%p1081) target = $region68
        $region67: #{tpu_custom_call.1} parent=63 // pred_region
          %s1084 = sand.u32 %s160, 1
          %s1085 = scalar_lea.sflag [#allocation6], %s1084
          %s1086 = sand.u32 %s160, 1
          %s1087 = smul.addr %s1086, 16
          %s1088 = scalar_lea.vmem [#allocation10], %s1087
          %1089 = dma.done %s1085, 256
        $region68: #{tpu_custom_call.1} parent=63 // pred_fallthru
          _
      $region64: #{tpu_custom_call.1} parent=5 // pred_fallthru
        _
    $region6: #{tpu_custom_call.1} parent=1 // loop_footer
      %s21 = sadd.s32 1, %s17
    $region7: #{tpu_custom_call.1} parent=1 // loop_footer_branch
      %16 = sbr.rel target = $region3
    $region8: #{tpu_custom_call.1} parent=1 // loop_exit
      _
    %1090 = vsyncpa [#allocation5], 1
    %s1091 = scalar_lea.sflag [#allocation5], 1
    %1092 = vsyncpa %s1091, 1
    %1093 = vsyncpa [#allocation8], 1
    %s1094 = scalar_lea.sflag [#allocation8], 1
    %1095 = vsyncpa %s1094, 1
    %1096 = vsyncpa [#allocation6], 1
    %s1097 = scalar_lea.sflag [#allocation6], 1
    %1098 = vsyncpa %s1097, 1

</llo_original>
